<compile_context>
chip_gen: v7x
topology: tpu7x:2x2x1
jax: 0.10.0
libtpu: 0.0.40
codegen_flags: <defaults>
</compile_context>

<pallas_src>
import jax
import jax.numpy as jnp
import numpy as np
from jax import lax
from jax.experimental import pallas as pl
from jax.experimental.pallas import tpu as pltpu

LN_EPS = 1e-12  # BertConfig default layer_norm_eps


def simple_model_kernel(e_ref, pslab_ref, w_ref, y_ref, out_ref):
    # e_ref:    [2, B, H] token-0 embedding sums (pre-LayerNorm) for embeddings_1/2
    # pslab_ref:[8, H]    rows = [gamma1, gamma2, beta1, beta2, b_eff, pad, pad, pad]
    # w_ref:    [H, H]    folded 6-layer encoder weight (x @ W form)
    # y_ref:    [B]       int32 labels in SMEM
    # out_ref:  [1, 1]    f32 scalar loss in SMEM
    _, B, H = e_ref.shape

    x = e_ref[...]                                   # [2, B, H]
    gam = pslab_ref[0:2, :][:, None, :]              # [2, 1, H]
    bet = pslab_ref[2:4, :][:, None, :]              # [2, 1, H]
    b_eff = pslab_ref[4:5, :]                        # [1, H]

    # Single vectorized LayerNorm pass over both embedding branches, then h = h1 + h2.
    # TODO(synk): BertEmbeddings dropout (p=0.1, train mode) omitted -> eval semantics.
    mu = jnp.mean(x, axis=-1, keepdims=True)
    var = jnp.mean((x - mu) ** 2, axis=-1, keepdims=True)
    ln = (x - mu) * lax.rsqrt(var + LN_EPS) * gam + bet   # [2, B, H]
    h = jnp.sum(ln, axis=0)                               # [B, H]

    # Folded 6-layer affine encoder: one MXU matmul + bias.
    logits = jnp.dot(h, w_ref[...], preferred_element_type=jnp.float32) + b_eff  # [B, H]

    # CrossEntropyLoss (mean reduction over batch), labels read from SMEM scalars.
    m = jnp.max(logits, axis=-1, keepdims=True)
    lse = m + jnp.log(jnp.sum(jnp.exp(logits - m), axis=-1, keepdims=True))      # [B, 1]

    row_ids = lax.broadcasted_iota(jnp.int32, (B, H), 0)
    col_ids = lax.broadcasted_iota(jnp.int32, (B, H), 1)
    label = jnp.zeros((B, H), jnp.int32)
    for b in range(B):  # B is tiny and static; builds a per-row label matrix
        label = jnp.where(row_ids == b, y_ref[b], label)
    picked = jnp.sum(jnp.where(col_ids == label, logits, 0.0),
                     axis=-1, keepdims=True)                                      # [B, 1]

    out_ref[0, 0] = jnp.sum(lse - picked) / B


def simple_model_forward(params, x, y):
    B, S = x.shape

    # Token-0 selection hoisted to the embedding gather: the loss only depends on h[:, 0]
    # and every op up to it is row-independent, so only B rows ever reach the kernel.
    tok0 = x[:, 0]                                                             # [B]

    def embed0(p):
        # word + position(0) + token_type(=0) embeddings for token 0 (wrapper gather glue).
        return (p["word"][tok0] + p["pos"][0][None, :] + p["tok"][0][None, :]
                ).astype(jnp.float32)                                          # [B, H]

    e = jnp.stack([embed0(params["emb1"]), embed0(params["emb2"])], axis=0)    # [2, B, H]

    vmem = pl.BlockSpec(memory_space=pltpu.MemorySpace.VMEM)
    smem = pl.BlockSpec(memory_space=pltpu.MemorySpace.SMEM)
    out = pl.pallas_call(
        simple_model_kernel,
        out_shape=jax.ShapeDtypeStruct((1, 1), jnp.float32),
        in_specs=[vmem, vmem, vmem, smem],
        out_specs=smem,
    )(e, params["pslab"], params["w_eff"], y)
    return out[0, 0]


def reference_forward(params, x, y):
    """Pure-JAX reference mirroring the PyTorch forward (eval-mode dropout)."""
    B, S = x.shape
    pos = jnp.arange(S)

    def embed_ln(p):
        e = p["word"][x] + p["pos"][pos][None] + p["tok"][0][None, None]
        mu = e.mean(-1, keepdims=True)
        var = ((e - mu) ** 2).mean(-1, keepdims=True)
        return (e - mu) / jnp.sqrt(var + LN_EPS) * p["gamma"] + p["beta"]

    h = embed_ln(params["emb1"]) + embed_ln(params["emb2"])
    for i in range(params["enc_w"].shape[0]):
        h = h @ params["enc_w"][i] + params["enc_b"][i, 0]
    logits = h[:, 0]                                              # [B, H]
    lse = jax.scipy.special.logsumexp(logits, axis=-1)
    picked = jnp.take_along_axis(logits, y[:, None], axis=-1)[:, 0]
    return jnp.mean(lse - picked)


def init_params(key, hidden, seq_len, vocab=25, type_vocab=2, n_layers=6):
    ks = jax.random.split(key, 4)

    def emb_params(k):
        k1, k2, k3 = jax.random.split(k, 3)
        return dict(
            word=0.02 * jax.random.normal(k1, (vocab, hidden), jnp.float32),
            pos=0.02 * jax.random.normal(k2, (seq_len, hidden), jnp.float32),
            tok=0.02 * jax.random.normal(k3, (type_vocab, hidden), jnp.float32),
            gamma=jnp.ones((hidden,), jnp.float32),
            beta=jnp.zeros((hidden,), jnp.float32),
        )

    kw, kb = jax.random.split(ks[2], 2)
    enc_w = (1.0 / np.sqrt(hidden)) * jax.random.normal(
        kw, (n_layers, hidden, hidden), jnp.float32)          # stored as x @ W form
    enc_b = 0.01 * jax.random.normal(kb, (n_layers, 1, hidden), jnp.float32)

    params = dict(emb1=emb_params(ks[0]), emb2=emb_params(ks[1]),
                  enc_w=enc_w, enc_b=enc_b)

    # --- Precomputed-once kernel constants (hoisted out of the per-call path) ---
    # Fold the purely-affine 6-layer encoder into one effective weight/bias.
    w_eff = enc_w[0]
    b_eff = enc_b[0]
    for i in range(1, n_layers):
        b_eff = b_eff @ enc_w[i] + enc_b[i]
        w_eff = w_eff @ enc_w[i]
    params["w_eff"] = w_eff                                   # [H, H]
    params["b_eff"] = b_eff                                   # [1, H]
    # Single [8, H] parameter slab: [gamma1, gamma2, beta1, beta2, b_eff, 0, 0, 0].
    params["pslab"] = jnp.concatenate(
        [params["emb1"]["gamma"][None, :], params["emb2"]["gamma"][None, :],
         params["emb1"]["beta"][None, :],  params["emb2"]["beta"][None, :],
         b_eff, jnp.zeros((3, hidden), jnp.float32)], axis=0)
    return params


if __name__ == "__main__":
    B, S, H = 2, 8, 32          # batch, seq_len, hidden_dim (num classes == hidden_dim)
    key = jax.random.PRNGKey(0)
    kp, kx, ky = jax.random.split(key, 3)

    params = init_params(kp, hidden=H, seq_len=S)
    x = jax.random.randint(kx, (B, S), 0, 25, dtype=jnp.int32)   # token ids, vocab=25
    y = jax.random.randint(ky, (B,), 0, H, dtype=jnp.int32)      # class labels

    loss = jax.block_until_ready(simple_model_forward(params, x, y))
    ref = jax.block_until_ready(reference_forward(params, x, y))
    # Slightly looser rtol: the folded affine encoder reassociates 6 f32 matmuls.
    assert np.allclose(np.asarray(loss), np.asarray(ref), rtol=1e-4, atol=1e-5), (loss, ref)

    print("KERNEL_OK")
</pallas_src>

<mosaic_0001>
module attributes {stable_mosaic.version = 11 : i64} {
  func.func @simple_model_kernel(%arg0: memref<2x2x32xf32, #tpu.memory_space<vmem>>, %arg1: memref<8x32xf32, #tpu.memory_space<vmem>>, %arg2: memref<32x32xf32, #tpu.memory_space<vmem>>, %arg3: memref<2xi32, #tpu.memory_space<smem>>, %arg4: memref<1x1xf32, #tpu.memory_space<smem>>) attributes {dimension_semantics = [], scalar_prefetch = 0 : i64, scratch_operands = 0 : i64, tpu.core_type = #tpu.core_type<tc>} {
    %c0 = arith.constant 0 : index
    %c0_0 = arith.constant 0 : index
    %c0_1 = arith.constant 0 : index
    %0 = vector.load %arg0[%c0, %c0_0, %c0_1] : memref<2x2x32xf32, #tpu.memory_space<vmem>>, vector<2x2x32xf32>
    %c0_2 = arith.constant 0 : index
    %c0_3 = arith.constant 0 : index
    %1 = vector.load %arg1[%c0_2, %c0_3] : memref<8x32xf32, #tpu.memory_space<vmem>>, vector<2x32xf32>
    %2 = vector.shape_cast %1 : vector<2x32xf32> to vector<2x1x32xf32>
    %c2 = arith.constant 2 : index
    %c0_4 = arith.constant 0 : index
    %3 = vector.load %arg1[%c2, %c0_4] : memref<8x32xf32, #tpu.memory_space<vmem>>, vector<2x32xf32>
    %4 = vector.shape_cast %3 : vector<2x32xf32> to vector<2x1x32xf32>
    %c4 = arith.constant 4 : index
    %c0_5 = arith.constant 0 : index
    %5 = vector.load %arg1[%c4, %c0_5] : memref<8x32xf32, #tpu.memory_space<vmem>>, vector<1x32xf32>
    %cst = arith.constant dense<0.000000e+00> : vector<2x2xf32>
    %6 = vector.multi_reduction <add>, %0, %cst [2] : vector<2x2x32xf32> to vector<2x2xf32>
    %7 = vector.shape_cast %6 : vector<2x2xf32> to vector<2x2x1xf32>
    %cst_6 = arith.constant 3.200000e+01 : f32
    %8 = vector.broadcast %cst_6 : f32 to vector<2x2x1xf32>
    %9 = arith.divf %7, %8 : vector<2x2x1xf32>
    %10 = vector.broadcast %9 : vector<2x2x1xf32> to vector<2x2x32xf32>
    %11 = arith.subf %0, %10 : vector<2x2x32xf32>
    %12 = arith.mulf %11, %11 : vector<2x2x32xf32>
    %cst_7 = arith.constant dense<0.000000e+00> : vector<2x2xf32>
    %13 = vector.multi_reduction <add>, %12, %cst_7 [2] : vector<2x2x32xf32> to vector<2x2xf32>
    %14 = vector.shape_cast %13 : vector<2x2xf32> to vector<2x2x1xf32>
    %cst_8 = arith.constant 3.200000e+01 : f32
    %15 = vector.broadcast %cst_8 : f32 to vector<2x2x1xf32>
    %16 = arith.divf %14, %15 : vector<2x2x1xf32>
    %17 = vector.broadcast %9 : vector<2x2x1xf32> to vector<2x2x32xf32>
    %18 = arith.subf %0, %17 : vector<2x2x32xf32>
    %cst_9 = arith.constant 9.99999996E-13 : f32
    %19 = vector.broadcast %cst_9 : f32 to vector<2x2x1xf32>
    %20 = arith.addf %16, %19 : vector<2x2x1xf32>
    %21 = math.rsqrt %20 : vector<2x2x1xf32>
    %22 = vector.broadcast %21 : vector<2x2x1xf32> to vector<2x2x32xf32>
    %23 = arith.mulf %18, %22 : vector<2x2x32xf32>
    %24 = vector.broadcast %2 : vector<2x1x32xf32> to vector<2x2x32xf32>
    %25 = arith.mulf %23, %24 : vector<2x2x32xf32>
    %26 = vector.broadcast %4 : vector<2x1x32xf32> to vector<2x2x32xf32>
    %27 = arith.addf %25, %26 : vector<2x2x32xf32>
    %cst_10 = arith.constant dense<0.000000e+00> : vector<2x32xf32>
    %28 = vector.multi_reduction <add>, %27, %cst_10 [0] : vector<2x2x32xf32> to vector<2x32xf32>
    %c0_11 = arith.constant 0 : index
    %c0_12 = arith.constant 0 : index
    %29 = vector.load %arg2[%c0_11, %c0_12] : memref<32x32xf32, #tpu.memory_space<vmem>>, vector<32x32xf32>
    %cst_13 = arith.constant dense<0.000000e+00> : vector<2x32xf32>
    %30 = tpu.matmul %28, %29, %cst_13 {dimension_numbers = #tpu.dot_dimension_numbers<[1], [0], [0], [1], [0, 0, 1, 1], [], []>} : vector<2x32xf32>, vector<32x32xf32>, vector<2x32xf32> -> vector<2x32xf32>
    %31 = vector.broadcast %5 : vector<1x32xf32> to vector<2x32xf32>
    %32 = arith.addf %30, %31 : vector<2x32xf32>
    %cst_14 = arith.constant dense<0xFF800000> : vector<2xf32>
    %33 = vector.multi_reduction <maximumf>, %32, %cst_14 [1] : vector<2x32xf32> to vector<2xf32>
    %34 = vector.shape_cast %33 : vector<2xf32> to vector<2x1xf32>
    %35 = vector.broadcast %34 : vector<2x1xf32> to vector<2x32xf32>
    %36 = arith.subf %32, %35 : vector<2x32xf32>
    %37 = math.exp %36 : vector<2x32xf32>
    %cst_15 = arith.constant dense<0.000000e+00> : vector<2xf32>
    %38 = vector.multi_reduction <add>, %37, %cst_15 [1] : vector<2x32xf32> to vector<2xf32>
    %39 = vector.shape_cast %38 : vector<2xf32> to vector<2x1xf32>
    %40 = math.log %39 : vector<2x1xf32>
    %41 = arith.addf %34, %40 : vector<2x1xf32>
    %42 = tpu.iota {dimensions = array<i32: 0>} : vector<2x32xi32>
    %43 = tpu.iota {dimensions = array<i32: 1>} : vector<2x32xi32>
    %c0_i32 = arith.constant 0 : i32
    %44 = vector.broadcast %c0_i32 : i32 to vector<2x32xi32>
    %c0_i32_16 = arith.constant 0 : i32
    %45 = vector.broadcast %c0_i32_16 : i32 to vector<2x32xi32>
    %46 = arith.cmpi eq, %42, %45 : vector<2x32xi32>
    %c0_17 = arith.constant 0 : index
    %47 = memref.load %arg3[%c0_17] : memref<2xi32, #tpu.memory_space<smem>>
    %48 = vector.broadcast %47 : i32 to vector<2x32xi32>
    %49 = arith.select %46, %48, %44 : vector<2x32xi1>, vector<2x32xi32>
    %c1_i32 = arith.constant 1 : i32
    %50 = vector.broadcast %c1_i32 : i32 to vector<2x32xi32>
    %51 = arith.cmpi eq, %42, %50 : vector<2x32xi32>
    %c1 = arith.constant 1 : index
    %52 = memref.load %arg3[%c1] : memref<2xi32, #tpu.memory_space<smem>>
    %53 = vector.broadcast %52 : i32 to vector<2x32xi32>
    %54 = arith.select %51, %53, %49 : vector<2x32xi1>, vector<2x32xi32>
    %55 = arith.cmpi eq, %43, %54 : vector<2x32xi32>
    %cst_18 = arith.constant 0.000000e+00 : f32
    %56 = vector.broadcast %cst_18 : f32 to vector<2x32xf32>
    %57 = arith.select %55, %32, %56 : vector<2x32xi1>, vector<2x32xf32>
    %cst_19 = arith.constant dense<0.000000e+00> : vector<2xf32>
    %58 = vector.multi_reduction <add>, %57, %cst_19 [1] : vector<2x32xf32> to vector<2xf32>
    %59 = vector.shape_cast %58 : vector<2xf32> to vector<2x1xf32>
    %60 = arith.subf %41, %59 : vector<2x1xf32>
    %61 = vector.shape_cast %60 : vector<2x1xf32> to vector<1x2x1xf32>
    %cst_20 = arith.constant dense<0.000000e+00> : vector<1xf32>
    %62 = vector.multi_reduction <add>, %61, %cst_20 [1, 2] : vector<1x2x1xf32> to vector<1xf32>
    %63 = vector.shape_cast %62 : vector<1xf32> to vector<1x1x1xf32>
    %64 = vector.extract %63[0, 0, 0] : f32 from vector<1x1x1xf32>
    %cst_21 = arith.constant 2.000000e+00 : f32
    %65 = arith.divf %64, %cst_21 : f32
    %c0_22 = arith.constant 0 : index
    %c0_23 = arith.constant 0 : index
    %66 = memref.load %arg4[%c0_22, %c0_23] : memref<1x1xf32, #tpu.memory_space<smem>>
    memref.store %65, %arg4[%c0_22, %c0_23] : memref<1x1xf32, #tpu.memory_space<smem>>
    return
  }
}

</mosaic_0001>

<llo_original>
// kernel: tpu_custom_call.1
$region0: #{tpu_custom_call.1}
  #allocation0 [shape = 'u32[]', space=smem, size = 0x4, offset = 0x4, fixed_abs, tag = 'smem constant byte address 0x4 - core index']
  #allocation1 [shape = 'u32[144,128]{1,0:T(1,128)}', space=vmem, size = 0x12000, scoped, tag = 'internal scratch']
  %s0 = inlined_call_operand.hbm [shape: f32[2,2,32], index: 0, kind: input, shape index: {}]
  %s1 = inlined_call_operand.hbm [shape: f32[8,32], index: 1, kind: input, shape index: {}]
  %s2 = inlined_call_operand.hbm [shape: f32[32,32], index: 2, kind: input, shape index: {}]
  %s3 = inlined_call_operand.vmem [shape: s32[2], index: 3, kind: input, shape index: {}]
  %s4 = inlined_call_operand.hbm [shape: f32[1,1], index: 4, kind: output, shape index: {}]
  %s5 = sld [smem:[#allocation0]]
  $region42: #{tpu_custom_call.1} parent=0
    _
  %s7 = ssub.s32 1, %s5
  %s8 = scalar_select 0, %s7, %s5
  $region1: #{tpu_custom_call.1} parent=0
    #allocation2 [shape = 'u8[2048]{0}', space=vmem, size = 0x800, scoped, tag = 'input window, operand 0, single buffered']
    #allocation3 [shape = 's32[1]{0}', space=sflag, size = 0x4, scoped, tag = 'scoped memory for tpu_custom_call.1']
    #allocation4 [shape = 's32[1]{0}', space=sflag, size = 0x4, scoped, tag = 'scoped memory for tpu_custom_call.1']
    #allocation5 [shape = 's32[1]{0}', space=sflag, size = 0x4, scoped, tag = 'scoped memory for tpu_custom_call.1']
    #allocation6 [shape = 'u8[4096]{0}', space=vmem, size = 0x1000, scoped, tag = 'input window, operand 1, single buffered']
    #allocation7 [shape = 's32[1]{0}', space=sflag, size = 0x4, scoped, tag = 'scoped memory for tpu_custom_call.1']
    #allocation8 [shape = 'u8[16384]{0}', space=vmem, size = 0x4000, scoped, tag = 'input window, operand 2, single buffered']
    #allocation9 [shape = 'u8[512]{0}', space=smem, size = 0x200, scoped, tag = 'input window, operand 3, single buffered']
    #allocation10 [shape = 'u8[512]{0}', space=smem, size = 0x200, scoped, tag = 'output window, operand 0, single buffered']
    %9 = vsyncpa [#allocation3], 0
    %10 = vsyncpa [#allocation7], 0
    %11 = vsyncpa [#allocation5], 0
    %12 = vsyncpa [#allocation4], 0
    // Predicated region
    $region2: #{tpu_custom_call.1} parent=1 // pred_check
      _
    $region3: #{tpu_custom_call.1} parent=1 // pred_check_branch
      %14 = sbr.rel (0) target = $region5
    $region4: #{tpu_custom_call.1} parent=1 // pred_region
      %s16 = ssub.s32 64, 64
      %17 = vsyncadd [#allocation3], %s16
      %s18 = sshll.u32 [#allocation2], 4
      %s19 = int_to_ptr.vmem [resolvable:$true] %s18
      %24 = dma.hbm_to_vmem [thread:$0]  %s0, 64, %s19, [#allocation3], 32, 32, 2
    $region5: #{tpu_custom_call.1} parent=1 // pred_fallthru
      _
    // Predicated region
    $region6: #{tpu_custom_call.1} parent=1 // pred_check
      _
    $region7: #{tpu_custom_call.1} parent=1 // pred_check_branch
      %26 = sbr.rel (0) target = $region9
    $region8: #{tpu_custom_call.1} parent=1 // pred_region
      %s28 = ssub.s32 128, 128
      %29 = vsyncadd [#allocation7], %s28
      %s31 = sshll.u32 [#allocation6], 4
      %s32 = int_to_ptr.vmem [resolvable:$true] %s31
      %34 = dma.hbm_to_vmem [thread:$0]  %s1, 128, %s32, [#allocation7]
    $region9: #{tpu_custom_call.1} parent=1 // pred_fallthru
      _
    // Predicated region
    $region10: #{tpu_custom_call.1} parent=1 // pred_check
      _
    $region11: #{tpu_custom_call.1} parent=1 // pred_check_branch
      %36 = sbr.rel (0) target = $region13
    $region12: #{tpu_custom_call.1} parent=1 // pred_region
      %s38 = ssub.s32 512, 512
      %39 = vsyncadd [#allocation7], %s38
      %s40 = sshll.u32 [#allocation8], 4
      %s41 = int_to_ptr.vmem [resolvable:$true] %s40
      %46 = dma.hbm_to_vmem [thread:$0]  %s2, 512, %s41, [#allocation7], 128, 128, 8
    $region13: #{tpu_custom_call.1} parent=1 // pred_fallthru
      _
    // Predicated region
    $region14: #{tpu_custom_call.1} parent=1 // pred_check
      _
    $region15: #{tpu_custom_call.1} parent=1 // pred_check_branch
      %48 = sbr.rel (0) target = $region17
    $region16: #{tpu_custom_call.1} parent=1 // pred_region
      %s50 = ssub.s32 16, 16
      %51 = vsyncadd [#allocation5], %s50
      %s53 = sshll.u32 %s3, 4
      %s54 = int_to_ptr.vmem [resolvable:$true] %s53
      %56 = dma.vmem_to_smem %s54, 16, [#allocation9], [#allocation5]
    $region17: #{tpu_custom_call.1} parent=1 // pred_fallthru
      _
    // Predicated region
    $region18: #{tpu_custom_call.1} parent=1 // pred_check
      _
    $region19: #{tpu_custom_call.1} parent=1 // pred_check_branch
      %58 = sbr.rel (0) target = $region21
    $region20: #{tpu_custom_call.1} parent=1 // pred_region
      %59 = dma.done [#allocation3], 64
    $region21: #{tpu_custom_call.1} parent=1 // pred_fallthru
      _
    // Predicated region
    $region22: #{tpu_custom_call.1} parent=1 // pred_check
      _
    $region23: #{tpu_custom_call.1} parent=1 // pred_check_branch
      %61 = sbr.rel (0) target = $region25
    $region24: #{tpu_custom_call.1} parent=1 // pred_region
      %62 = dma.done [#allocation7], 128
    $region25: #{tpu_custom_call.1} parent=1 // pred_fallthru
      _
    // Predicated region
    $region26: #{tpu_custom_call.1} parent=1 // pred_check
      _
    $region27: #{tpu_custom_call.1} parent=1 // pred_check_branch
      %64 = sbr.rel (0) target = $region29
    $region28: #{tpu_custom_call.1} parent=1 // pred_region
      %65 = dma.done [#allocation7], 512
    $region29: #{tpu_custom_call.1} parent=1 // pred_fallthru
      _
    // Predicated region
    $region30: #{tpu_custom_call.1} parent=1 // pred_check
      _
    $region31: #{tpu_custom_call.1} parent=1 // pred_check_branch
      %67 = sbr.rel (0) target = $region33
    $region32: #{tpu_custom_call.1} parent=1 // pred_region
      %68 = dma.done [#allocation5], 16
    $region33: #{tpu_custom_call.1} parent=1 // pred_fallthru
      _
    %69 = sfence
    %v70 = vld [vmem:[#allocation2] sm:$0x3]
    %v71 = vld [vmem:[#allocation2 + $0x2] sm:$0x3]
    %v72 = vld [vmem:[#allocation6] sm:$0x3]
    %v75 = vunpack.c.l.s4 1966171168
    %v76 = vunpack.c.0.s8 %v75
    %v77 = vlaneseq
    %v78 = vshrl.u32 %v77, 7
    %v79 = vsub.s32 %v76, %v78
    %v80 = vrot.slane %v72, %v79
    %v81 = vcombine.high %v80, %v80
    %v83 = vunpack.c.l.s4 1966171168
    %v84 = vunpack.c.0.s8 %v83
    %v85 = vlaneseq
    %v86 = vshrl.u32 %v85, 7
    %v87 = vsub.s32 %v84, %v86
    %v88 = vrot.slane %v80, %v87
    %v90 = vunpack.c.l.s4 1966171168
    %v91 = vunpack.c.0.s8 %v90
    %v92 = vlaneseq
    %v93 = vshrl.u32 %v92, 7
    %v94 = vsub.s32 %v91, %v93
    %v95 = vrot.slane %v81, %v94
    %v96 = vld [vmem:[#allocation6 + $0x2] sm:$0x3]
    %v99 = vunpack.c.l.s4 1966171168
    %v100 = vunpack.c.0.s8 %v99
    %v101 = vlaneseq
    %v102 = vshrl.u32 %v101, 7
    %v103 = vsub.s32 %v100, %v102
    %v104 = vrot.slane %v96, %v103
    %v105 = vcombine.high %v104, %v104
    %v107 = vunpack.c.l.s4 1966171168
    %v108 = vunpack.c.0.s8 %v107
    %v109 = vlaneseq
    %v110 = vshrl.u32 %v109, 7
    %v111 = vsub.s32 %v108, %v110
    %v112 = vrot.slane %v104, %v111
    %v114 = vunpack.c.l.s4 1966171168
    %v115 = vunpack.c.0.s8 %v114
    %v116 = vlaneseq
    %v117 = vshrl.u32 %v116, 7
    %v118 = vsub.s32 %v115, %v117
    %v119 = vrot.slane %v105, %v118
    %v120 = vld [vmem:[#allocation6 + $0x4] sm:$0x1]
    %vm121 = vcmask 254976
    %v122 = vsel %vm121, %v70, 0.0
    %123 = vadd.xlane.f32.xlu0 %v122
    %v124 = vpop.xlane.xlu0 %123
    %v125 = vsel %vm121, %v71, 0.0
    %126 = vadd.xlane.f32.xlu0 %v125
    %v127 = vpop.xlane.xlu0 %126
    %v128 = vrcp.pop 32.0
    %v129 = vmul.f32 %v124, %v128
    %v130 = vmul.f32 %v127, %v128
    %v131 = vsub.f32 %v70, %v129
    %v132 = vsub.f32 %v71, %v130
    %v133 = vmul.f32 %v131, %v131
    %v134 = vmul.f32 %v132, %v132
    %v135 = vsel %vm121, %v133, 0.0
    %136 = vadd.xlane.f32.xlu0 %v135
    %v137 = vpop.xlane.xlu0 %136
    %v138 = vsel %vm121, %v134, 0.0
    %139 = vadd.xlane.f32.xlu0 %v138
    %v140 = vpop.xlane.xlu0 %139
    %v141 = vmul.f32 %v137, %v128
    %v142 = vmul.f32 %v140, %v128
    %v143 = vadd.f32 %v141, 1e-12
    %v144 = vadd.f32 %v142, 1e-12
    %v145 = vrsqrt.pop %v143
    %v146 = vrsqrt.pop %v144
    %v147 = vmul.f32 %v131, %v145
    %v148 = vmul.f32 %v132, %v146
    %v149 = vlaneseq
    %v150 = vshrl.u32 %v149, 7
    %v151 = vsub.s32 0, %v150
    %v152 = vrot.slane %v88, %v151
    %v153 = vlaneseq
    %v154 = vshrl.u32 %v153, 7
    %v155 = vsub.s32 0, %v154
    %v156 = vrot.slane %v95, %v155
    %v159 = vmul.f32 %v147, %v152
    %v160 = vmul.f32 %v148, %v156
    %v161 = vlaneseq
    %v162 = vshrl.u32 %v161, 7
    %v163 = vsub.s32 0, %v162
    %v164 = vrot.slane %v112, %v163
    %v165 = vlaneseq
    %v166 = vshrl.u32 %v165, 7
    %v167 = vsub.s32 0, %v166
    %v168 = vrot.slane %v119, %v167
    %v171 = vadd.f32 %v159, %v164
    %v172 = vadd.f32 %v160, %v168
    %v173 = vsel %vm121, %v171, 0.0
    %v174 = vsel %vm121, %v172, 0.0
    %v175 = vadd.f32 %v173, %v174
    %v176 = vld [vmem:[#allocation8] sm:$0xff]
    %v177 = vld [vmem:[#allocation8 + $0x8] sm:$0xff]
    %v178 = vld [vmem:[#allocation8 + $0x10] sm:$0xff]
    %v179 = vld [vmem:[#allocation8 + $0x18] sm:$0xff]
    %v180 = vlaneseq
    %v181 = vshrl.u32 %v180, 7
    %v182 = vsub.s32 0, %v181
    %v183 = vrot.slane %v120, %v182
    %vm184 = vcmask 261120
    %v186 = vsel %vm184, %v175, 0
    %188 = vmatprep.subr.mxu0 0.0
    %189 = vmatpush1.msra.mxu0 %v176
    %190 = vmatprep.subr.mxu0 0.0
    %191 = vmatpush1.msra.mxu0 %v177
    %192 = vmatprep.subr.mxu0 0.0
    %193 = vmatpush1.msra.mxu0 %v178
    %194 = vmatprep.subr.mxu0 0.0
    %195 = vmatpush1.msra.mxu0 %v179
    %196 = vmatprep.subr.mxu0 0.0
    %197 = vmatpush1.msra.mxu0 0.0
    %198 = vmatprep.subr.mxu0 0.0
    %199 = vmatpush1.msra.mxu0 0.0
    %200 = vmatprep.subr.mxu0 0.0
    %201 = vmatpush1.msra.mxu0 0.0
    %202 = vmatprep.subr.mxu0 0.0
    %203 = vmatpush1.msra.mxu0 0.0
    %204 = vmatprep.subr.mxu0 0.0
    %205 = vmatpush1.msra.mxu0 0.0
    %206 = vmatprep.subr.mxu0 0.0
    %207 = vmatpush1.msra.mxu0 0.0
    %208 = vmatprep.subr.mxu0 0.0
    %209 = vmatpush1.msra.mxu0 0.0
    %210 = vmatprep.subr.mxu0 0.0
    %211 = vmatpush1.msra.mxu0 0.0
    %212 = vmatprep.subr.mxu0 0.0
    %213 = vmatpush1.msra.mxu0 0.0
    %214 = vmatprep.subr.mxu0 0.0
    %215 = vmatpush1.msra.mxu0 0.0
    %216 = vmatprep.subr.mxu0 0.0
    %217 = vmatpush1.msra.mxu0 0.0
    %218 = vmatprep.subr.mxu0 0.0
    %219 = vmatpush1.msra.mxu0 0.0
    %220 = vmatprep.subr.mxu0 0.0
    %221 = vmatpush1.msra.mxu0 0.0
    %222 = vmatprep.subr.mxu0 0.0
    %223 = vmatpush1.msra.mxu0 0.0
    %224 = vmatprep.subr.mxu0 0.0
    %225 = vmatpush1.msra.mxu0 0.0
    %226 = vmatprep.subr.mxu0 0.0
    %227 = vmatpush1.msra.mxu0 0.0
    %228 = vmatprep.subr.mxu0 0.0
    %229 = vmatpush1.msra.mxu0 0.0
    %230 = vmatprep.subr.mxu0 0.0
    %231 = vmatpush1.msra.mxu0 0.0
    %232 = vmatprep.subr.mxu0 0.0
    %233 = vmatpush1.msra.mxu0 0.0
    %234 = vmatprep.subr.mxu0 0.0
    %235 = vmatpush1.msra.mxu0 0.0
    %236 = vmatprep.subr.mxu0 0.0
    %237 = vmatpush1.msra.mxu0 0.0
    %238 = vmatprep.subr.mxu0 0.0
    %239 = vmatpush1.msra.mxu0 0.0
    %240 = vmatprep.subr.mxu0 0.0
    %241 = vmatpush1.msra.mxu0 0.0
    %242 = vmatprep.subr.mxu0 0.0
    %243 = vmatpush1.msra.mxu0 0.0
    %244 = vmatprep.subr.mxu0 0.0
    %245 = vmatpush1.msra.mxu0 0.0
    %246 = vmatprep.subr.mxu0 0.0
    %247 = vmatpush1.msra.mxu0 0.0
    %248 = vmatprep.subr.mxu0 0.0
    %249 = vmatpush1.msra.mxu0 0.0
    %250 = vmatprep.subr.mxu0 0.0
    %251 = vmatpush1.msra.mxu0 0.0
    %252 = vmatprep.mubr.f32.mxu0 0.0
    %253 = vmatmul.mubr.f32.gmra.mrb[0].mxu0 %v186
    %v254 = vpop.f32.mrb[0].mxu0
    %v255 = vadd.f32 %v183, %v254
    %v256 = vpop.f32.mrb[0].mxu0
    %257 = vdwg.mxu0
    %v258 = vsel %vm121, %v255, -inf
    %259 = vmax.xlane.f32.xlu0 %v258
    %v260 = vpop.xlane.xlu0 %259
    %v261 = vsub.f32 %v255, %v260
    %v262 = vmul.f32 %v261, 1.442695
    %v263 = vpow.pop %v262
    %v264 = vsel %vm121, %v263, 0.0
    %265 = vadd.xlane.f32.xlu0 %v264
    %v266 = vpop.xlane.xlu0 %265
    %v267 = vlog2.pop %v266
    %v268 = vmul.f32 %v267, 0.6931472
    %v269 = vadd.f32 %v260, %v268
    %v270 = vlaneseq
    %v271 = vshrl.u32 %v270, 7
    %v272 = vlaneseq
    %v273 = vand.u32 %v272, 127
    %vm274 = vcmp.eq.s32.totalorder %v271, 0
    %s275 = sld [smem:[#allocation9]]
    %v276 = vstv %s275
    %v277 = vsel %vm274, %v276, 0
    %vm278 = vcmp.eq.s32.totalorder %v271, 1
    %s279 = sld [smem:[#allocation9 + $0x1]]
    %v280 = vstv %s279
    %v281 = vsel %vm278, %v280, %v277
    %vm282 = vcmp.eq.s32.totalorder %v273, %v281
    %v283 = vsel %vm282, %v255, 0.0
    %v284 = vsel %vm121, %v283, 0.0
    %285 = vadd.xlane.f32.xlu0 %v284
    %v286 = vpop.xlane.xlu0 %285
    %v287 = vsub.f32 %v269, %v286
    %vm288 = vcmask 1024
    %v289 = vsel %vm288, %v287, 0.0
    %290 = vadd.xlane.f32.xlu0 %v289
    %v291 = vpop.xlane.xlu0 %290
    %v292 = vrot.slane %v291, 4
    %v293 = vadd.f32 %v291, %v292
    %v294 = vrot.slane %v293, 2
    %v295 = vadd.f32 %v293, %v294
    %v296 = vrot.slane %v295, 1
    %v297 = vadd.f32 %v295, %v296
    %s298 = vtos %v297
    %v299 = vrcp.pop 2.0
    %s300 = vtos %v299
    %s301 = smul.f32 %s298, %s300
    %s302 = scalar_lea.smem [#allocation10], 0
    %303 = sst [smem:[%s302]] %s301
    // Predicated region
    $region34: #{tpu_custom_call.1} parent=1 // pred_check
      _
    $region35: #{tpu_custom_call.1} parent=1 // pred_check_branch
      %305 = sbr.rel (0) target = $region37
    $region36: #{tpu_custom_call.1} parent=1 // pred_region
      %s307 = ssub.s32 16, 16
      %308 = vsyncadd [#allocation4], %s307
      %311 = dma.smem_to_hbm [#allocation10], 16, %s4, [#allocation4]
    $region37: #{tpu_custom_call.1} parent=1 // pred_fallthru
      _
    // Predicated region
    $region38: #{tpu_custom_call.1} parent=1 // pred_check
      _
    $region39: #{tpu_custom_call.1} parent=1 // pred_check_branch
      %313 = sbr.rel (0) target = $region41
    $region40: #{tpu_custom_call.1} parent=1 // pred_region
      %314 = dma.done [#allocation4], 16
    $region41: #{tpu_custom_call.1} parent=1 // pred_fallthru
      _
    %315 = sfence
    %316 = vsyncpa [#allocation3], 1
    %317 = vsyncpa [#allocation7], 1
    %318 = vsyncpa [#allocation4], 1
    %319 = vsyncpa [#allocation5], 1

</llo_original>
